<compile_context>
chip_gen: v7x
topology: tpu7x:2x2x1
jax: 0.10.0
libtpu: 0.0.40
codegen_flags: <defaults>
</compile_context>

<pallas_src>
import functools

import jax
import jax.numpy as jnp
from jax import lax
from jax.experimental import pallas as pl
from jax.experimental.pallas import tpu as pltpu

_EPS = 1e-6


def _lane_roll(x, shift):
    """+/-1 lane shift. XLU rotate (pltpu.roll) when the lane dim is vreg-native;
    jnp.roll (slice+concat) fallback for arbitrary/test-only widths."""
    if x.shape[-1] % 128 == 0:
        return pltpu.roll(x, shift=shift, axis=1)
    return jnp.roll(x, shift, axis=1)


def _grad_kernel(x_ref, halo_ref, o_ref):
    """One (batch, row-tile) grid step; channels 0..2 are folded into the block.

    x_ref:    (3, TH, W)  body rows of this row-tile
    halo_ref: (3, 2, W)   [c, 0] = row just above the tile (zeros at global top edge)
                          [c, 1] = row just below the tile (zeros at global bottom edge)
    o_ref:    (3, TH, W)  sqrt(v^2 + h^2 + eps)
    """
    _, TH, W = x_ref.shape
    col = lax.broadcasted_iota(jnp.int32, (TH, W), 1)  # hoisted; reused by all 3 channels

    for c in range(3):  # static unroll over the 3 channels in the block
        xc = x_ref[c]                      # (TH, W)
        up = halo_ref[c, 0:1, :]           # (1, W) row above tile (zero at global top)
        dn = halo_ref[c, 1:2, :]           # (1, W) row below tile (zero at global bottom)

        # ---- vertical: v[r] = x[r+1] - x[r-1] via shifted views + 1-row boundary
        # fixups from the halo (no VMEM staging slab, no extra stores).
        if TH == 1:
            x_rp1, x_rm1 = dn, up
        else:
            x_rp1 = jnp.concatenate([xc[1:, :], dn], axis=0)   # row r -> x[r+1]
            x_rm1 = jnp.concatenate([up, xc[:-1, :]], axis=0)  # row r -> x[r-1]
        v = x_rp1.astype(jnp.float32) - x_rm1.astype(jnp.float32)

        # ---- horizontal: h[j] = x[j+1] - x[j-1] (zero padded); lane roll + edge mask.
        if W == 1:
            h = jnp.zeros((TH, W), jnp.float32)
        else:
            x_jp1 = jnp.where(col < W - 1, _lane_roll(xc, -1), 0.0)
            x_jm1 = jnp.where(col > 0, _lane_roll(xc, 1), 0.0)
            h = x_jp1.astype(jnp.float32) - x_jm1.astype(jnp.float32)

        # Accumulate in f32 (exact for bf16 inputs, 1e-6 eps is representable),
        # cast only the final result back to the output dtype.
        o_ref[c] = jnp.sqrt(v * v + h * h + _EPS).astype(o_ref.dtype)


def _chip_vmem_and_block_target():
    """Device VMEM capacity + generation-aware block-size target (bytes)."""
    try:
        vmem_cap = int(pltpu.get_tpu_info().vmem_capacity_bytes)
    except Exception:
        vmem_cap = 64 * 1024 * 1024  # conservative (v7x-sized)
    # v7x is the only generation with 64 MiB VMEM per TensorCore; its ~3.2 TB/s
    # HBM makes the ~0.35us per-grid-step overhead noticeable at 4 MiB blocks,
    # so aim for ~8 MiB there.  v5e/v6e (128 MiB VMEM, <=1.4 TB/s HBM) already
    # sit on the roofline plateau at ~4 MiB.
    target_block = 8 * 1024 * 1024 if vmem_cap <= 64 * 1024 * 1024 else 4 * 1024 * 1024
    return vmem_cap, target_block


def _pick_row_block(H, W, itemsize, target_block_bytes):
    """Largest row-slab height TH such that TH | H, TH is sublane-aligned, and the
    (3, TH, W) block stays around target_block_bytes (2 in + 2 out double-buffered
    blocks stay well under the scoped-VMEM limits on v5e/v6e/v7x)."""
    sub = {4: 8, 2: 16, 1: 32}.get(itemsize, 8)
    max_th = max(sub, target_block_bytes // (3 * W * itemsize))
    if H <= max_th:
        return H
    th = (min(max_th, H) // sub) * sub
    while th >= sub:
        if H % th == 0:
            return th
        th -= sub
    return H  # no aligned divisor found: fall back to the full plane


def _build_halos(x, TH, nT):
    """(N, 3, nT, 2, W): for each row-tile t, the row just above ([..., 0, :]) and
    just below ([..., 1, :]) the tile, pre-masked to zero at the global image
    edges.  Built directly in this layout (no transpose / relayout before the
    pallas_call); only 2*(nT-1) rows per plane are gathered -> negligible HBM
    traffic and the (N,3,H,W) channel slice is never materialized."""
    N, C, H, W = x.shape
    dt = x.dtype
    zrow = jnp.zeros((N, 3, 1, W), dt)
    if nT == 1:
        up = zrow
        dn = zrow
    else:
        up = jnp.concatenate([zrow, x[:, :3, TH - 1:H - 1:TH, :]], axis=2)  # (N, 3, nT, W)
        dn = jnp.concatenate([x[:, :3, TH:H:TH, :], zrow], axis=2)          # (N, 3, nT, W)
    return jnp.stack([up, dn], axis=3)                                      # (N, 3, nT, 2, W)


@functools.partial(jax.jit, static_argnames=("row_block",))
def get_gradient_nopadding(x, row_block=None):
    """x: (N, C, H, W) with C >= 3. Returns (N, 3, H, W), dtype preserved."""
    N, C, H, W = x.shape
    if C < 3:
        raise ValueError(f"Get_gradient_nopadding requires C >= 3, got C={C}")
    itemsize = jnp.dtype(x.dtype).itemsize

    vmem_cap, target_block = _chip_vmem_and_block_target()
    TH = row_block if row_block is not None else _pick_row_block(H, W, itemsize, target_block)
    if H % TH != 0:
        TH = H
    nT = H // TH

    halos = _build_halos(x, TH, nT)

    # VMEM footprint: double-buffered input + output blocks, halo buffers, plus
    # headroom for the in-body f32 temporaries (shifted views, v, h).  Raise the
    # scoped limit only when needed and never past the device capacity.
    block_bytes = 3 * TH * W * itemsize
    halo_bytes = 3 * 2 * W * itemsize
    temp_bytes = 6 * TH * W * 4
    need = 4 * block_bytes + 4 * halo_bytes + temp_bytes
    vmem_limit = None
    if need > 12 * 1024 * 1024:
        cap = max(vmem_cap - 8 * 1024 * 1024, 16 * 1024 * 1024)
        vmem_limit = min(int(1.25 * need) + (2 << 20), cap)

    elems = N * 3 * H * W
    cost = pl.CostEstimate(
        flops=5 * elems,                 # 2 sub + 2 mul + 1 add per output element
        transcendentals=elems,           # sqrt
        bytes_accessed=int(2 * elems * itemsize + halos.size * itemsize),
    )

    # TODO(synk): when W is not a multiple of 128 (e.g. the 16-wide self-test),
    # loads/stores are lane-masked; production image widths are 128-aligned, so
    # that path is test-only and left unoptimized (would need folding rows into
    # the lane dim plus extra stencil masking).
    return pl.pallas_call(
        _grad_kernel,
        out_shape=jax.ShapeDtypeStruct((N, 3, H, W), x.dtype),
        grid=(N, nT),
        in_specs=[
            # Full x goes in untouched; the index map picks channels 0..2 and row-tile t.
            pl.BlockSpec((None, 3, TH, W), lambda n, t: (n, 0, t, 0)),
            # Pre-gathered, pre-masked halo rows for this (batch, tile).
            pl.BlockSpec((None, 3, None, 2, W), lambda n, t: (n, 0, t, 0, 0)),
        ],
        out_specs=pl.BlockSpec((None, 3, TH, W), lambda n, t: (n, 0, t, 0)),
        compiler_params=pltpu.CompilerParams(
            dimension_semantics=("parallel", "parallel"),
            vmem_limit_bytes=vmem_limit,
        ),
        cost_estimate=cost,
    )(x, halos)


def _reference(x):
    """Pure-JAX reference mirroring F.conv2d with padding=1 semantics."""
    x3 = x[:, :3].astype(jnp.float32)
    xp = jnp.pad(x3, ((0, 0), (0, 0), (1, 1), (1, 1)))
    v = xp[:, :, 2:, 1:-1] - xp[:, :, :-2, 1:-1]   # x[i+1,j] - x[i-1,j]
    h = xp[:, :, 1:-1, 2:] - xp[:, :, 1:-1, :-2]   # x[i,j+1] - x[i,j-1]
    return jnp.sqrt(v * v + h * h + 1e-6)


if __name__ == "__main__":
    key0, key1 = jax.random.split(jax.random.PRNGKey(0))

    # Primary case: (N=2, C=4, H=16, W=16) -> single row-tile per plane, C > 3 path.
    x = jax.random.normal(key0, (2, 4, 16, 16), dtype=jnp.float32)
    out = jax.block_until_ready(get_gradient_nopadding(x))
    ref = _reference(x)
    assert out.shape == (2, 3, 16, 16), out.shape
    assert jnp.allclose(out, ref, atol=1e-5, rtol=1e-5), "mismatch vs reference (single tile)"

    # Second case: force row tiling (TH=8 -> 4 tiles) to exercise the halo path.
    x2 = jax.random.normal(key1, (1, 3, 32, 16), dtype=jnp.float32)
    out2 = jax.block_until_ready(get_gradient_nopadding(x2, row_block=8))
    ref2 = _reference(x2)
    assert out2.shape == (1, 3, 32, 16), out2.shape
    assert jnp.allclose(out2, ref2, atol=1e-5, rtol=1e-5), "mismatch vs reference (row tiles)"

    print("KERNEL_OK")
</pallas_src>

<mosaic_0001>
module attributes {stable_mosaic.version = 11 : i64} {
  func.func @_grad_kernel(%arg0: i32, %arg1: i32, %arg2: memref<1x3x16x16xf32, #tpu.memory_space<vmem>>, %arg3: memref<1x3x1x2x16xf32, #tpu.memory_space<vmem>>, %arg4: memref<1x3x16x16xf32, #tpu.memory_space<vmem>>) attributes {dimension_semantics = [#tpu.dimension_semantics<parallel>, #tpu.dimension_semantics<parallel>], iteration_bounds = array<i64: 2, 1>, scalar_prefetch = 0 : i64, scratch_operands = 0 : i64, tpu.core_type = #tpu.core_type<tc>, window_params = [{transform_indices = @transform_0, window_bounds = array<i64: 1, 3, 16, 16>}, {transform_indices = @transform_1, window_bounds = array<i64: 1, 3, 1, 2, 16>}, {transform_indices = @transform_2, window_bounds = array<i64: 1, 3, 16, 16>}]} {
    %0 = tpu.iota {dimensions = array<i32: 1>} : vector<16x16xi32>
    %c0 = arith.constant 0 : index
    %c0_0 = arith.constant 0 : index
    %c0_1 = arith.constant 0 : index
    %c0_2 = arith.constant 0 : index
    %1 = vector.load %arg2[%c0, %c0_0, %c0_1, %c0_2] : memref<1x3x16x16xf32, #tpu.memory_space<vmem>>, vector<1x1x16x16xf32>
    %2 = vector.shape_cast %1 : vector<1x1x16x16xf32> to vector<16x16xf32>
    %c0_3 = arith.constant 0 : index
    %c0_4 = arith.constant 0 : index
    %c0_5 = arith.constant 0 : index
    %c0_6 = arith.constant 0 : index
    %c0_7 = arith.constant 0 : index
    %3 = vector.load %arg3[%c0_3, %c0_4, %c0_5, %c0_6, %c0_7] : memref<1x3x1x2x16xf32, #tpu.memory_space<vmem>>, vector<1x1x1x1x16xf32>
    %4 = vector.shape_cast %3 : vector<1x1x1x1x16xf32> to vector<1x16xf32>
    %c0_8 = arith.constant 0 : index
    %c0_9 = arith.constant 0 : index
    %c0_10 = arith.constant 0 : index
    %c1 = arith.constant 1 : index
    %c0_11 = arith.constant 0 : index
    %5 = vector.load %arg3[%c0_8, %c0_9, %c0_10, %c1, %c0_11] : memref<1x3x1x2x16xf32, #tpu.memory_space<vmem>>, vector<1x1x1x1x16xf32>
    %6 = vector.shape_cast %5 : vector<1x1x1x1x16xf32> to vector<1x16xf32>
    %7 = vector.extract_strided_slice %2 {offsets = [1, 0], sizes = [15, 16], strides = [1, 1]} : vector<16x16xf32> to vector<15x16xf32>
    %8 = tpu.concatenate %7, %6 in 0 : vector<15x16xf32>, vector<1x16xf32> -> vector<16x16xf32>
    %9 = vector.extract_strided_slice %2 {offsets = [0, 0], sizes = [15, 16], strides = [1, 1]} : vector<16x16xf32> to vector<15x16xf32>
    %10 = tpu.concatenate %4, %9 in 0 : vector<1x16xf32>, vector<15x16xf32> -> vector<16x16xf32>
    %11 = arith.subf %8, %10 : vector<16x16xf32>
    %c15_i32 = arith.constant 15 : i32
    %12 = vector.broadcast %c15_i32 : i32 to vector<16x16xi32>
    %13 = arith.cmpi slt, %0, %12 : vector<16x16xi32>
    %14 = vector.extract_strided_slice %2 {offsets = [0, 1], sizes = [16, 15], strides = [1, 1]} : vector<16x16xf32> to vector<16x15xf32>
    %15 = vector.extract_strided_slice %2 {offsets = [0, 0], sizes = [16, 1], strides = [1, 1]} : vector<16x16xf32> to vector<16x1xf32>
    %16 = tpu.concatenate %14, %15 in 1 : vector<16x15xf32>, vector<16x1xf32> -> vector<16x16xf32>
    %cst = arith.constant 0.000000e+00 : f32
    %17 = vector.broadcast %cst : f32 to vector<16x16xf32>
    %18 = arith.select %13, %16, %17 : vector<16x16xi1>, vector<16x16xf32>
    %c0_i32 = arith.constant 0 : i32
    %19 = vector.broadcast %c0_i32 : i32 to vector<16x16xi32>
    %20 = arith.cmpi sgt, %0, %19 : vector<16x16xi32>
    %21 = vector.extract_strided_slice %2 {offsets = [0, 15], sizes = [16, 1], strides = [1, 1]} : vector<16x16xf32> to vector<16x1xf32>
    %22 = vector.extract_strided_slice %2 {offsets = [0, 0], sizes = [16, 15], strides = [1, 1]} : vector<16x16xf32> to vector<16x15xf32>
    %23 = tpu.concatenate %21, %22 in 1 : vector<16x1xf32>, vector<16x15xf32> -> vector<16x16xf32>
    %cst_12 = arith.constant 0.000000e+00 : f32
    %24 = vector.broadcast %cst_12 : f32 to vector<16x16xf32>
    %25 = arith.select %20, %23, %24 : vector<16x16xi1>, vector<16x16xf32>
    %26 = arith.subf %18, %25 : vector<16x16xf32>
    %27 = arith.mulf %11, %11 : vector<16x16xf32>
    %28 = arith.mulf %26, %26 : vector<16x16xf32>
    %29 = arith.addf %27, %28 : vector<16x16xf32>
    %cst_13 = arith.constant 9.99999997E-7 : f32
    %30 = vector.broadcast %cst_13 : f32 to vector<16x16xf32>
    %31 = arith.addf %29, %30 : vector<16x16xf32>
    %32 = math.sqrt %31 : vector<16x16xf32>
    %c0_14 = arith.constant 0 : index
    %c0_15 = arith.constant 0 : index
    %c0_16 = arith.constant 0 : index
    %c0_17 = arith.constant 0 : index
    %33 = vector.load %arg4[%c0_14, %c0_15, %c0_16, %c0_17] : memref<1x3x16x16xf32, #tpu.memory_space<vmem>>, vector<1x1x16x16xf32>
    %34 = vector.shape_cast %33 : vector<1x1x16x16xf32> to vector<16x16xf32>
    %35 = vector.shape_cast %32 : vector<16x16xf32> to vector<1x1x16x16xf32>
    tpu.vector_store %arg4[%c0_14, %c0_15, %c0_16, %c0_17], %35 {strides = array<i32>} : memref<1x3x16x16xf32, #tpu.memory_space<vmem>>, vector<1x1x16x16xf32>,
    %c0_18 = arith.constant 0 : index
    %c1_19 = arith.constant 1 : index
    %c0_20 = arith.constant 0 : index
    %c0_21 = arith.constant 0 : index
    %36 = vector.load %arg2[%c0_18, %c1_19, %c0_20, %c0_21] : memref<1x3x16x16xf32, #tpu.memory_space<vmem>>, vector<1x1x16x16xf32>
    %37 = vector.shape_cast %36 : vector<1x1x16x16xf32> to vector<16x16xf32>
    %c0_22 = arith.constant 0 : index
    %c1_23 = arith.constant 1 : index
    %c0_24 = arith.constant 0 : index
    %c0_25 = arith.constant 0 : index
    %c0_26 = arith.constant 0 : index
    %38 = vector.load %arg3[%c0_22, %c1_23, %c0_24, %c0_25, %c0_26] : memref<1x3x1x2x16xf32, #tpu.memory_space<vmem>>, vector<1x1x1x1x16xf32>
    %39 = vector.shape_cast %38 : vector<1x1x1x1x16xf32> to vector<1x16xf32>
    %c0_27 = arith.constant 0 : index
    %c1_28 = arith.constant 1 : index
    %c0_29 = arith.constant 0 : index
    %c1_30 = arith.constant 1 : index
    %c0_31 = arith.constant 0 : index
    %40 = vector.load %arg3[%c0_27, %c1_28, %c0_29, %c1_30, %c0_31] : memref<1x3x1x2x16xf32, #tpu.memory_space<vmem>>, vector<1x1x1x1x16xf32>
    %41 = vector.shape_cast %40 : vector<1x1x1x1x16xf32> to vector<1x16xf32>
    %42 = vector.extract_strided_slice %37 {offsets = [1, 0], sizes = [15, 16], strides = [1, 1]} : vector<16x16xf32> to vector<15x16xf32>
    %43 = tpu.concatenate %42, %41 in 0 : vector<15x16xf32>, vector<1x16xf32> -> vector<16x16xf32>
    %44 = vector.extract_strided_slice %37 {offsets = [0, 0], sizes = [15, 16], strides = [1, 1]} : vector<16x16xf32> to vector<15x16xf32>
    %45 = tpu.concatenate %39, %44 in 0 : vector<1x16xf32>, vector<15x16xf32> -> vector<16x16xf32>
    %46 = arith.subf %43, %45 : vector<16x16xf32>
    %c15_i32_32 = arith.constant 15 : i32
    %47 = vector.broadcast %c15_i32_32 : i32 to vector<16x16xi32>
    %48 = arith.cmpi slt, %0, %47 : vector<16x16xi32>
    %49 = vector.extract_strided_slice %37 {offsets = [0, 1], sizes = [16, 15], strides = [1, 1]} : vector<16x16xf32> to vector<16x15xf32>
    %50 = vector.extract_strided_slice %37 {offsets = [0, 0], sizes = [16, 1], strides = [1, 1]} : vector<16x16xf32> to vector<16x1xf32>
    %51 = tpu.concatenate %49, %50 in 1 : vector<16x15xf32>, vector<16x1xf32> -> vector<16x16xf32>
    %cst_33 = arith.constant 0.000000e+00 : f32
    %52 = vector.broadcast %cst_33 : f32 to vector<16x16xf32>
    %53 = arith.select %48, %51, %52 : vector<16x16xi1>, vector<16x16xf32>
    %c0_i32_34 = arith.constant 0 : i32
    %54 = vector.broadcast %c0_i32_34 : i32 to vector<16x16xi32>
    %55 = arith.cmpi sgt, %0, %54 : vector<16x16xi32>
    %56 = vector.extract_strided_slice %37 {offsets = [0, 15], sizes = [16, 1], strides = [1, 1]} : vector<16x16xf32> to vector<16x1xf32>
    %57 = vector.extract_strided_slice %37 {offsets = [0, 0], sizes = [16, 15], strides = [1, 1]} : vector<16x16xf32> to vector<16x15xf32>
    %58 = tpu.concatenate %56, %57 in 1 : vector<16x1xf32>, vector<16x15xf32> -> vector<16x16xf32>
    %cst_35 = arith.constant 0.000000e+00 : f32
    %59 = vector.broadcast %cst_35 : f32 to vector<16x16xf32>
    %60 = arith.select %55, %58, %59 : vector<16x16xi1>, vector<16x16xf32>
    %61 = arith.subf %53, %60 : vector<16x16xf32>
    %62 = arith.mulf %46, %46 : vector<16x16xf32>
    %63 = arith.mulf %61, %61 : vector<16x16xf32>
    %64 = arith.addf %62, %63 : vector<16x16xf32>
    %cst_36 = arith.constant 9.99999997E-7 : f32
    %65 = vector.broadcast %cst_36 : f32 to vector<16x16xf32>
    %66 = arith.addf %64, %65 : vector<16x16xf32>
    %67 = math.sqrt %66 : vector<16x16xf32>
    %c0_37 = arith.constant 0 : index
    %c1_38 = arith.constant 1 : index
    %c0_39 = arith.constant 0 : index
    %c0_40 = arith.constant 0 : index
    %68 = vector.load %arg4[%c0_37, %c1_38, %c0_39, %c0_40] : memref<1x3x16x16xf32, #tpu.memory_space<vmem>>, vector<1x1x16x16xf32>
    %69 = vector.shape_cast %68 : vector<1x1x16x16xf32> to vector<16x16xf32>
    %70 = vector.shape_cast %67 : vector<16x16xf32> to vector<1x1x16x16xf32>
    tpu.vector_store %arg4[%c0_37, %c1_38, %c0_39, %c0_40], %70 {strides = array<i32>} : memref<1x3x16x16xf32, #tpu.memory_space<vmem>>, vector<1x1x16x16xf32>,
    %c0_41 = arith.constant 0 : index
    %c2 = arith.constant 2 : index
    %c0_42 = arith.constant 0 : index
    %c0_43 = arith.constant 0 : index
    %71 = vector.load %arg2[%c0_41, %c2, %c0_42, %c0_43] : memref<1x3x16x16xf32, #tpu.memory_space<vmem>>, vector<1x1x16x16xf32>
    %72 = vector.shape_cast %71 : vector<1x1x16x16xf32> to vector<16x16xf32>
    %c0_44 = arith.constant 0 : index
    %c2_45 = arith.constant 2 : index
    %c0_46 = arith.constant 0 : index
    %c0_47 = arith.constant 0 : index
    %c0_48 = arith.constant 0 : index
    %73 = vector.load %arg3[%c0_44, %c2_45, %c0_46, %c0_47, %c0_48] : memref<1x3x1x2x16xf32, #tpu.memory_space<vmem>>, vector<1x1x1x1x16xf32>
    %74 = vector.shape_cast %73 : vector<1x1x1x1x16xf32> to vector<1x16xf32>
    %c0_49 = arith.constant 0 : index
    %c2_50 = arith.constant 2 : index
    %c0_51 = arith.constant 0 : index
    %c1_52 = arith.constant 1 : index
    %c0_53 = arith.constant 0 : index
    %75 = vector.load %arg3[%c0_49, %c2_50, %c0_51, %c1_52, %c0_53] : memref<1x3x1x2x16xf32, #tpu.memory_space<vmem>>, vector<1x1x1x1x16xf32>
    %76 = vector.shape_cast %75 : vector<1x1x1x1x16xf32> to vector<1x16xf32>
    %77 = vector.extract_strided_slice %72 {offsets = [1, 0], sizes = [15, 16], strides = [1, 1]} : vector<16x16xf32> to vector<15x16xf32>
    %78 = tpu.concatenate %77, %76 in 0 : vector<15x16xf32>, vector<1x16xf32> -> vector<16x16xf32>
    %79 = vector.extract_strided_slice %72 {offsets = [0, 0], sizes = [15, 16], strides = [1, 1]} : vector<16x16xf32> to vector<15x16xf32>
    %80 = tpu.concatenate %74, %79 in 0 : vector<1x16xf32>, vector<15x16xf32> -> vector<16x16xf32>
    %81 = arith.subf %78, %80 : vector<16x16xf32>
    %c15_i32_54 = arith.constant 15 : i32
    %82 = vector.broadcast %c15_i32_54 : i32 to vector<16x16xi32>
    %83 = arith.cmpi slt, %0, %82 : vector<16x16xi32>
    %84 = vector.extract_strided_slice %72 {offsets = [0, 1], sizes = [16, 15], strides = [1, 1]} : vector<16x16xf32> to vector<16x15xf32>
    %85 = vector.extract_strided_slice %72 {offsets = [0, 0], sizes = [16, 1], strides = [1, 1]} : vector<16x16xf32> to vector<16x1xf32>
    %86 = tpu.concatenate %84, %85 in 1 : vector<16x15xf32>, vector<16x1xf32> -> vector<16x16xf32>
    %cst_55 = arith.constant 0.000000e+00 : f32
    %87 = vector.broadcast %cst_55 : f32 to vector<16x16xf32>
    %88 = arith.select %83, %86, %87 : vector<16x16xi1>, vector<16x16xf32>
    %c0_i32_56 = arith.constant 0 : i32
    %89 = vector.broadcast %c0_i32_56 : i32 to vector<16x16xi32>
    %90 = arith.cmpi sgt, %0, %89 : vector<16x16xi32>
    %91 = vector.extract_strided_slice %72 {offsets = [0, 15], sizes = [16, 1], strides = [1, 1]} : vector<16x16xf32> to vector<16x1xf32>
    %92 = vector.extract_strided_slice %72 {offsets = [0, 0], sizes = [16, 15], strides = [1, 1]} : vector<16x16xf32> to vector<16x15xf32>
    %93 = tpu.concatenate %91, %92 in 1 : vector<16x1xf32>, vector<16x15xf32> -> vector<16x16xf32>
    %cst_57 = arith.constant 0.000000e+00 : f32
    %94 = vector.broadcast %cst_57 : f32 to vector<16x16xf32>
    %95 = arith.select %90, %93, %94 : vector<16x16xi1>, vector<16x16xf32>
    %96 = arith.subf %88, %95 : vector<16x16xf32>
    %97 = arith.mulf %81, %81 : vector<16x16xf32>
    %98 = arith.mulf %96, %96 : vector<16x16xf32>
    %99 = arith.addf %97, %98 : vector<16x16xf32>
    %cst_58 = arith.constant 9.99999997E-7 : f32
    %100 = vector.broadcast %cst_58 : f32 to vector<16x16xf32>
    %101 = arith.addf %99, %100 : vector<16x16xf32>
    %102 = math.sqrt %101 : vector<16x16xf32>
    %c0_59 = arith.constant 0 : index
    %c2_60 = arith.constant 2 : index
    %c0_61 = arith.constant 0 : index
    %c0_62 = arith.constant 0 : index
    %103 = vector.load %arg4[%c0_59, %c2_60, %c0_61, %c0_62] : memref<1x3x16x16xf32, #tpu.memory_space<vmem>>, vector<1x1x16x16xf32>
    %104 = vector.shape_cast %103 : vector<1x1x16x16xf32> to vector<16x16xf32>
    %105 = vector.shape_cast %102 : vector<16x16xf32> to vector<1x1x16x16xf32>
    tpu.vector_store %arg4[%c0_59, %c2_60, %c0_61, %c0_62], %105 {strides = array<i32>} : memref<1x3x16x16xf32, #tpu.memory_space<vmem>>, vector<1x1x16x16xf32>,
    return
  }
  func.func @transform_0(%arg0: i32, %arg1: i32) -> (i32, i32, i32, i32) {
    %c0_i32 = arith.constant 0 : i32
    %c0_i32_0 = arith.constant 0 : i32
    %c0_i32_1 = arith.constant 0 : i32
    return %arg0, %c0_i32, %arg1, %c0_i32_0 : i32, i32, i32, i32
  }
  func.func @transform_1(%arg0: i32, %arg1: i32) -> (i32, i32, i32, i32, i32) {
    %c0_i32 = arith.constant 0 : i32
    %c0_i32_0 = arith.constant 0 : i32
    %c0_i32_1 = arith.constant 0 : i32
    %c0_i32_2 = arith.constant 0 : i32
    return %arg0, %c0_i32, %arg1, %c0_i32_0, %c0_i32_1 : i32, i32, i32, i32, i32
  }
  func.func @transform_2(%arg0: i32, %arg1: i32) -> (i32, i32, i32, i32) {
    %c0_i32 = arith.constant 0 : i32
    %c0_i32_0 = arith.constant 0 : i32
    %c0_i32_1 = arith.constant 0 : i32
    return %arg0, %c0_i32, %arg1, %c0_i32_0 : i32, i32, i32, i32
  }
}

</mosaic_0001>

<llo_original>
// kernel: get_gradient_nopadding.1
$region0: #{get_gradient_nopadding.1}
  #allocation0 [shape = 'u32[]', space=smem, size = 0x4, offset = 0x4, fixed_abs, tag = 'smem constant byte address 0x4 - core index']
  #allocation1 [shape = 'u32[144,128]{1,0:T(1,128)}', space=vmem, size = 0x12000, scoped, tag = 'internal scratch']
  %s0 = inlined_call_operand.hbm [shape: f32[2,4,16,16], index: 0, kind: input, shape index: {}]
  %s1 = inlined_call_operand.vmem [shape: f32[2,3,1,2,16], index: 1, kind: input, shape index: {}]
  %s2 = inlined_call_operand.hbm [shape: f32[2,3,16,16], index: 2, kind: output, shape index: {}]
  %s3 = sld [smem:[#allocation0]]
  $region45: #{get_gradient_nopadding.1} parent=0
    _
  %s5 = ssub.s32 1, %s3
  %s6 = scalar_select 0, %s5, %s3
  $region1: #{get_gradient_nopadding.1} parent=0
    #allocation2 [shape = 'u8[49152]{0}', space=vmem, size = 0xc000, scoped, tag = 'input window, operand 0']
    #allocation3 [shape = 's32[2]{0}', space=sflag, size = 0x8, scoped, tag = 'scoped memory for get_gradient_nopadding.1']
    #allocation4 [shape = 's32[2]{0}', space=sflag, size = 0x8, scoped, tag = 'scoped memory for get_gradient_nopadding.1']
    #allocation5 [shape = 'u8[49152]{0}', space=vmem, size = 0xc000, scoped, tag = 'output window, operand 0']
    %7 = vsyncpa [#allocation3], 0
    %s8 = scalar_lea.sflag [#allocation3], 1
    %9 = vsyncpa %s8, 0
    %10 = vsyncpa [#allocation4], 0
    %s11 = scalar_lea.sflag [#allocation4], 1
    %12 = vsyncpa %s11, 0
    loop: start=0, step=1, limit=4
    $region2: #{get_gradient_nopadding.1} parent=1 // loop_pre_header
      _
    $region3: #{get_gradient_nopadding.1} parent=1 // loop_header
      %s14 = sphi 0, %s18
      %p15 = scmp.ge.s32.totalorder %s14, 4
      %s21 = sphi 0, %s33
      %s22 = sphi 0, %s29
      %s23 = sphi 0, %s21
      %s24 = sphi 0, %s22
      %s25 = sphi 0, %s23
      %s26 = sphi 0, %s24
      %s38 = sphi 0, %s40
      %s41 = sphi 0, %s38
      %s42 = sphi 0, %s41
      %s58 = sphi 0, %s42
      %s66 = sphi 0, %s68
      %s69 = sphi 0, %s66
      %s70 = sphi 0, %s69
      %s86 = sphi 0, %s70
      %s94 = sphi 0, %s96
      %s97 = sphi 0, %s94
      %s98 = sphi 0, %s97
      %s114 = sphi 0, %s98
    $region4: #{get_gradient_nopadding.1} parent=1 // loop_header_branch
      %17 = sbr.rel (%p15) target = $region8
    $region5: #{get_gradient_nopadding.1} parent=1 // loop_body
      %s19 = ssub.s32 %s14, 1
      %s20 = ssub.s32 %s14, 2
      %s27 = sadd.s32 1, %s22
      %p28 = scmp.ge.s32.totalorder %s27, 1
      %s29 = scalar_select %p28, 0, %s27
      %s30 = sadd.s32 1, %s21
      %s31 = scalar_select %p28, %s30, %s21
      %p32 = scmp.ge.s32.totalorder %s31, 2
      %s33 = scalar_select %p32, 0, %s31
      %s34 = ssub.s32 %s21, %s33
      %s35 = ssub.s32 %s22, %s29
      %s36 = sor.u32 %s34, %s35
      %p37 = scmp.eq.s32.totalorder %s36, 0
      %s39 = sadd.s32 %s38, 1
      %s40 = scalar_select %p37, %s38, %s39
      %p43 = pneg %p37
      %p44 = scmp.eq.s32.totalorder %s14, 1
      %p45 = por %p43, %p44
      %p46 = scmp.ne.s32.totalorder %s38, %s41
      %p47 = scmp.eq.s32.totalorder %s14, 0
      %p48 = por %p46, %p47
      %p49 = scmp.ne.s32.totalorder %s38, %s41
      %p50 = scmp.eq.s32.totalorder %s19, 1
      %p51 = por %p49, %p50
      %p52 = scmp.ne.s32.totalorder %s41, %s42
      %p53 = scmp.eq.s32.totalorder %s19, 0
      %p54 = por %p52, %p53
      %p55 = scmp.ne.s32.totalorder %s41, %s42
      %p56 = scmp.eq.s32.totalorder %s20, 1
      %p57 = por %p55, %p56
      %p59 = scmp.ne.s32.totalorder %s42, %s58
      %p60 = scmp.eq.s32.totalorder %s20, 0
      %p61 = por %p59, %p60
      %s62 = ssub.s32 %s21, %s33
      %s63 = ssub.s32 %s22, %s29
      %s64 = sor.u32 %s62, %s63
      %p65 = scmp.eq.s32.totalorder %s64, 0
      %s67 = sadd.s32 %s66, 1
      %s68 = scalar_select %p65, %s66, %s67
      %p71 = pneg %p65
      %p72 = scmp.eq.s32.totalorder %s14, 1
      %p73 = por %p71, %p72
      %p74 = scmp.ne.s32.totalorder %s66, %s69
      %p75 = scmp.eq.s32.totalorder %s14, 0
      %p76 = por %p74, %p75
      %p77 = scmp.ne.s32.totalorder %s66, %s69
      %p78 = scmp.eq.s32.totalorder %s19, 1
      %p79 = por %p77, %p78
      %p80 = scmp.ne.s32.totalorder %s69, %s70
      %p81 = scmp.eq.s32.totalorder %s19, 0
      %p82 = por %p80, %p81
      %p83 = scmp.ne.s32.totalorder %s69, %s70
      %p84 = scmp.eq.s32.totalorder %s20, 1
      %p85 = por %p83, %p84
      %p87 = scmp.ne.s32.totalorder %s70, %s86
      %p88 = scmp.eq.s32.totalorder %s20, 0
      %p89 = por %p87, %p88
      %s90 = ssub.s32 %s21, %s33
      %s91 = ssub.s32 %s22, %s29
      %s92 = sor.u32 %s90, %s91
      %p93 = scmp.eq.s32.totalorder %s92, 0
      %s95 = sadd.s32 %s94, 1
      %s96 = scalar_select %p93, %s94, %s95
      %p99 = pneg %p93
      %p100 = scmp.eq.s32.totalorder %s14, 1
      %p101 = por %p99, %p100
      %p102 = scmp.ne.s32.totalorder %s94, %s97
      %p103 = scmp.eq.s32.totalorder %s14, 0
      %p104 = por %p102, %p103
      %p105 = scmp.ne.s32.totalorder %s94, %s97
      %p106 = scmp.eq.s32.totalorder %s19, 1
      %p107 = por %p105, %p106
      %p108 = scmp.ne.s32.totalorder %s97, %s98
      %p109 = scmp.eq.s32.totalorder %s19, 0
      %p110 = por %p108, %p109
      %p111 = scmp.ne.s32.totalorder %s97, %s98
      %p112 = scmp.eq.s32.totalorder %s20, 1
      %p113 = por %p111, %p112
      %p115 = scmp.ne.s32.totalorder %s98, %s114
      %p116 = scmp.eq.s32.totalorder %s20, 0
      %p117 = por %p115, %p116
      %p118 = scmp.le.s32.totalorder 1, %s14
      %p119 = scmp.lt.s32.totalorder %s14, 3
      %p120 = pnand %p118, %p119
      %p121 = pneg %p120
      // Predicated region
      $region9: #{get_gradient_nopadding.1} parent=5 // pred_check
        _
      $region10: #{get_gradient_nopadding.1} parent=5 // pred_check_branch
        %123 = sbr.rel (%p120) target = $region12
      $region11: #{get_gradient_nopadding.1} parent=5 // pred_region
        %s124 = ssub.s32 %s14, 1
      $region12: #{get_gradient_nopadding.1} parent=5 // pred_fallthru
        _
      %p125 = scmp.lt.s32.totalorder %s14, 2
      // Predicated region
      $region13: #{get_gradient_nopadding.1} parent=5 // pred_check
        %p126 = pneg %p125
      $region14: #{get_gradient_nopadding.1} parent=5 // pred_check_branch
        %128 = sbr.rel (%p126) target = $region16
      $region15: #{get_gradient_nopadding.1} parent=5 // pred_region
        // Predicated region
        $region17: #{get_gradient_nopadding.1} parent=15 // pred_check
          %p129 = pneg %p48
        $region18: #{get_gradient_nopadding.1} parent=15 // pred_check_branch
          %131 = sbr.rel (%p129) target = $region20
        $region19: #{get_gradient_nopadding.1} parent=15 // pred_region
          %s132 = sand.u32 %s38, 1
          %s133 = scalar_lea.sflag [#allocation3], %s132
          %s134 = sand.u32 %s38, 1
          %s135 = smul.addr %s134, 48
          %s136 = scalar_lea.vmem [#allocation2], %s135
          %s137 = smul.u32 2, %s22
          %s139 = ssub.s32 768, 768
          %140 = vsyncadd %s133, %s139
          %s141 = smul.addr %s21, 8
          %s142 = sadd.s32 %s137, %s141
          %s143 = smul.addr %s142, 128
          %s144 = scalar_lea.hbm %s0, %s143
          %s145 = sshll.u32 %s136, 4
          %s146 = int_to_ptr.vmem [resolvable:$true] %s145
          %151 = dma.hbm_to_vmem [thread:$0]  %s144, 768, %s146, %s133, 128, 128, 8
        $region20: #{get_gradient_nopadding.1} parent=15 // pred_fallthru
          _
        // Predicated region
        $region21: #{get_gradient_nopadding.1} parent=15 // pred_check
          %p152 = pneg %p76
        $region22: #{get_gradient_nopadding.1} parent=15 // pred_check_branch
          %154 = sbr.rel (%p152) target = $region24
        $region23: #{get_gradient_nopadding.1} parent=15 // pred_region
          %p155 = scmp.lt.s32.totalorder %s21, 1
          %s156 = scalar_select %p155, %s21, 1
          %p157 = scmp.lt.s32.totalorder %s22, 0
          %s158 = scalar_select %p157, %s22, 0
          %s159 = smul.addr %s156, 3
          %s160 = sadd.s32 %s158, %s159
          %s161 = smul.addr %s160, 2
          %s162 = scalar_lea.vmem %s1, %s161
        $region24: #{get_gradient_nopadding.1} parent=15 // pred_fallthru
          _
      $region16: #{get_gradient_nopadding.1} parent=5 // pred_fallthru
        _
      %p163 = scmp.le.s32.totalorder 1, %s14
      %p164 = scmp.lt.s32.totalorder %s14, 3
      %p165 = pnand %p163, %p164
      %p166 = pneg %p165
      // Predicated region
      $region25: #{get_gradient_nopadding.1} parent=5 // pred_check
        _
      $region26: #{get_gradient_nopadding.1} parent=5 // pred_check_branch
        %168 = sbr.rel (%p165) target = $region28
      $region27: #{get_gradient_nopadding.1} parent=5 // pred_region
        %s169 = ssub.s32 %s14, 1
        %s170 = sand.u32 %s41, 1
        %s171 = scalar_lea.sflag [#allocation3], %s170
        %s172 = sand.u32 %s41, 1
        %s173 = smul.addr %s172, 48
        %s174 = scalar_lea.vmem [#allocation2], %s173
        // Predicated region
        $region29: #{get_gradient_nopadding.1} parent=27 // pred_check
          %p175 = pneg %p54
        $region30: #{get_gradient_nopadding.1} parent=27 // pred_check_branch
          %177 = sbr.rel (%p175) target = $region32
        $region31: #{get_gradient_nopadding.1} parent=27 // pred_region
          %178 = dma.done %s171, 768
        $region32: #{get_gradient_nopadding.1} parent=27 // pred_fallthru
          _
        %s179 = sand.u32 %s41, 1
        %s180 = scalar_lea.sflag [#allocation3], %s179
        %s181 = sand.u32 %s41, 1
        %s182 = smul.addr %s181, 48
        %s183 = scalar_lea.vmem [#allocation2], %s182
        %p184 = pneg %p54
        %p185 = pneg %p51
        %p186 = scmp.lt.s32.totalorder %s23, 1
        %s187 = scalar_select %p186, %s23, 1
        %p188 = scmp.lt.s32.totalorder %s24, 0
        %s189 = scalar_select %p188, %s24, 0
        %s190 = smul.addr %s187, 3
        %s191 = sadd.s32 %s189, %s190
        %s192 = smul.addr %s191, 2
        %s193 = scalar_lea.vmem %s1, %s192
        %p194 = pneg %p82
        %p195 = pneg %p79
        %p196 = pneg %p110
        %p197 = pneg %p107
        %s198 = sand.u32 %s97, 1
        %s199 = scalar_lea.sflag [#allocation4], %s198
        %s200 = sand.u32 %s97, 1
        %s201 = smul.addr %s200, 48
        %s202 = scalar_lea.vmem [#allocation5], %s201
        %s203 = smul.u32 2, %s24
        %p204 = scmp.lt.s32.totalorder %s23, 1
        %s205 = scalar_select %p204, %s23, 1
        %p206 = scmp.lt.s32.totalorder %s24, 0
        %s207 = scalar_select %p206, %s24, 0
        %s208 = smul.addr %s205, 3
        %s209 = sadd.s32 %s207, %s208
        %s210 = smul.addr %s209, 2
        %s211 = scalar_lea.vmem %s1, %s210
        %s212 = smul.u32 2, %s24
        %v213 = vlaneseq
        %v214 = vand.u32 %v213, 127
        %v215 = vld [vmem:[%s174] sm:$0xff]
        %v216 = vld [vmem:[%s174 + $0x8] sm:$0xff]
        %v217 = vld [vmem:[%s211] sm:$0x1]
        %v218 = vld [vmem:[%s211 + $0x1] sm:$0x1]
        %vm221 = vcmask 1046528
        %v222 = vrot.slane %v215, 1
        %v223 = vrot.slane %v216, 1
        %v224 = vsel %vm221, %v222, %v223
        %v228 = vrot.slane %v218, 1
        %v230 = vsel %vm221, %v223, %v228
        %vm231 = vcmask 1040384
        %v232 = vrot.slane %v215, 7
        %v233 = vrot.slane %v216, 7
        %v234 = vsel %vm231, %v232, %v233
        %v237 = vsel %vm231, %v217, %v232
        %v238 = vsub.f32 %v224, %v237
        %v239 = vsub.f32 %v230, %v234
        %vm240 = vcmp.lt.s32.totalorder %v214, 15
        %241 = vrot.lane.b32.xlu0 %v215, 127
        %v242 = vpop.permute.xlu0 %241
        %243 = vrot.lane.b32.xlu0 %v216, 127
        %v244 = vpop.permute.xlu0 %243
        %247 = vrot.lane.b32.xlu0 %v215, 15
        %v248 = vpop.permute.xlu0 %247
        %249 = vrot.lane.b32.xlu0 %v216, 15
        %v250 = vpop.permute.xlu0 %249
        %vm253 = vcmask 121856
        %v254 = vsel %vm253, %v242, %v248
        %v255 = vsel %vm253, %v244, %v250
        %v256 = vsel %vm240, %v254, 0.0
        %v257 = vsel %vm240, %v255, 0.0
        %vm258 = vcmp.gt.s32.totalorder %v214, 0
        %259 = vrot.lane.b32.xlu0 %v215, 113
        %v260 = vpop.permute.xlu0 %259
        %261 = vrot.lane.b32.xlu0 %v216, 113
        %v262 = vpop.permute.xlu0 %261
        %265 = vrot.lane.b32.xlu0 %v215, 1
        %v266 = vpop.permute.xlu0 %265
        %267 = vrot.lane.b32.xlu0 %v216, 1
        %v268 = vpop.permute.xlu0 %267
        %vm271 = vcmask 7168
        %v272 = vsel %vm271, %v260, %v266
        %v273 = vsel %vm271, %v262, %v268
        %v274 = vsel %vm258, %v272, 0.0
        %v275 = vsel %vm258, %v273, 0.0
        %v276 = vsub.f32 %v256, %v274
        %v277 = vsub.f32 %v257, %v275
        %v278 = vmul.f32 %v238, %v238
        %v279 = vmul.f32 %v239, %v239
        %v280 = vmul.f32 %v276, %v276
        %v281 = vmul.f32 %v277, %v277
        %v282 = vadd.f32 %v278, %v280
        %v283 = vadd.f32 %v279, %v281
        %v284 = vadd.f32 %v282, 1e-06
        %v285 = vadd.f32 %v283, 1e-06
        %v286 = vrsqrt.pop %v284
        %v287 = vmul.f32 %v284, %v286
        %vm288 = vcmp.eq.f32.partialorder %v284, inf
        %v289 = vsel %vm288, %v284, %v287
        %vm290 = vcmp.eq.f32.partialorder %v284, 0.0
        %v291 = vand.u32 %v284, 2147483648
        %v292 = vsel %vm290, %v291, %v289
        %v293 = vrsqrt.pop %v285
        %v294 = vmul.f32 %v285, %v293
        %vm295 = vcmp.eq.f32.partialorder %v285, inf
        %v296 = vsel %vm295, %v285, %v294
        %vm297 = vcmp.eq.f32.partialorder %v285, 0.0
        %v298 = vand.u32 %v285, 2147483648
        %v299 = vsel %vm297, %v298, %v296
        %vm300 = vcmask 130048
        %301 = vst.msk [vmem:[%s202] sm:$0xff] %vm300, %v292
        %302 = vst.msk [vmem:[%s202 + $0x8] sm:$0xff] %vm300, %v299
        %s303 = scalar_lea.vmem %s174, 16 [#allocation2]
        %v304 = vld [vmem:[%s303] sm:$0xff]
        %v305 = vld [vmem:[%s303 + $0x8] sm:$0xff]
        %s306 = scalar_lea.vmem %s211, 2
        %v307 = vld [vmem:[%s306] sm:$0x1]
        %v308 = vld [vmem:[%s306 + $0x1] sm:$0x1]
        %v311 = vrot.slane %v304, 1
        %v312 = vrot.slane %v305, 1
        %v313 = vsel %vm221, %v311, %v312
        %v317 = vrot.slane %v308, 1
        %v319 = vsel %vm221, %v312, %v317
        %v320 = vrot.slane %v304, 7
        %v321 = vrot.slane %v305, 7
        %v322 = vsel %vm231, %v320, %v321
        %v325 = vsel %vm231, %v307, %v320
        %v326 = vsub.f32 %v313, %v325
        %v327 = vsub.f32 %v319, %v322
        %328 = vrot.lane.b32.xlu0 %v304, 127
        %v329 = vpop.permute.xlu0 %328
        %330 = vrot.lane.b32.xlu0 %v305, 127
        %v331 = vpop.permute.xlu0 %330
        %334 = vrot.lane.b32.xlu0 %v304, 15
        %v335 = vpop.permute.xlu0 %334
        %336 = vrot.lane.b32.xlu0 %v305, 15
        %v337 = vpop.permute.xlu0 %336
        %v340 = vsel %vm253, %v329, %v335
        %v341 = vsel %vm253, %v331, %v337
        %v342 = vsel %vm240, %v340, 0.0
        %v343 = vsel %vm240, %v341, 0.0
        %344 = vrot.lane.b32.xlu0 %v304, 113
        %v345 = vpop.permute.xlu0 %344
        %346 = vrot.lane.b32.xlu0 %v305, 113
        %v347 = vpop.permute.xlu0 %346
        %350 = vrot.lane.b32.xlu0 %v304, 1
        %v351 = vpop.permute.xlu0 %350
        %352 = vrot.lane.b32.xlu0 %v305, 1
        %v353 = vpop.permute.xlu0 %352
        %v356 = vsel %vm271, %v345, %v351
        %v357 = vsel %vm271, %v347, %v353
        %v358 = vsel %vm258, %v356, 0.0
        %v359 = vsel %vm258, %v357, 0.0
        %v360 = vsub.f32 %v342, %v358
        %v361 = vsub.f32 %v343, %v359
        %v362 = vmul.f32 %v326, %v326
        %v363 = vmul.f32 %v327, %v327
        %v364 = vmul.f32 %v360, %v360
        %v365 = vmul.f32 %v361, %v361
        %v366 = vadd.f32 %v362, %v364
        %v367 = vadd.f32 %v363, %v365
        %v368 = vadd.f32 %v366, 1e-06
        %v369 = vadd.f32 %v367, 1e-06
        %v370 = vrsqrt.pop %v368
        %v371 = vmul.f32 %v368, %v370
        %vm372 = vcmp.eq.f32.partialorder %v368, inf
        %v373 = vsel %vm372, %v368, %v371
        %vm374 = vcmp.eq.f32.partialorder %v368, 0.0
        %v375 = vand.u32 %v368, 2147483648
        %v376 = vsel %vm374, %v375, %v373
        %v377 = vrsqrt.pop %v369
        %v378 = vmul.f32 %v369, %v377
        %vm379 = vcmp.eq.f32.partialorder %v369, inf
        %v380 = vsel %vm379, %v369, %v378
        %vm381 = vcmp.eq.f32.partialorder %v369, 0.0
        %v382 = vand.u32 %v369, 2147483648
        %v383 = vsel %vm381, %v382, %v380
        %s384 = scalar_lea.vmem %s202, 16 [#allocation5]
        %385 = vst.msk [vmem:[%s384] sm:$0xff] %vm300, %v376
        %386 = vst.msk [vmem:[%s384 + $0x8] sm:$0xff] %vm300, %v383
        %s387 = scalar_lea.vmem %s174, 32 [#allocation2]
        %v388 = vld [vmem:[%s387] sm:$0xff]
        %v389 = vld [vmem:[%s387 + $0x8] sm:$0xff]
        %s390 = scalar_lea.vmem %s211, 4
        %v391 = vld [vmem:[%s390] sm:$0x1]
        %v392 = vld [vmem:[%s390 + $0x1] sm:$0x1]
        %v395 = vrot.slane %v388, 1
        %v396 = vrot.slane %v389, 1
        %v397 = vsel %vm221, %v395, %v396
        %v401 = vrot.slane %v392, 1
        %v403 = vsel %vm221, %v396, %v401
        %v404 = vrot.slane %v388, 7
        %v405 = vrot.slane %v389, 7
        %v406 = vsel %vm231, %v404, %v405
        %v409 = vsel %vm231, %v391, %v404
        %v410 = vsub.f32 %v397, %v409
        %v411 = vsub.f32 %v403, %v406
        %412 = vrot.lane.b32.xlu0 %v388, 127
        %v413 = vpop.permute.xlu0 %412
        %414 = vrot.lane.b32.xlu0 %v389, 127
        %v415 = vpop.permute.xlu0 %414
        %418 = vrot.lane.b32.xlu0 %v388, 15
        %v419 = vpop.permute.xlu0 %418
        %420 = vrot.lane.b32.xlu0 %v389, 15
        %v421 = vpop.permute.xlu0 %420
        %v424 = vsel %vm253, %v413, %v419
        %v425 = vsel %vm253, %v415, %v421
        %v426 = vsel %vm240, %v424, 0.0
        %v427 = vsel %vm240, %v425, 0.0
        %428 = vrot.lane.b32.xlu0 %v388, 113
        %v429 = vpop.permute.xlu0 %428
        %430 = vrot.lane.b32.xlu0 %v389, 113
        %v431 = vpop.permute.xlu0 %430
        %434 = vrot.lane.b32.xlu0 %v388, 1
        %v435 = vpop.permute.xlu0 %434
        %436 = vrot.lane.b32.xlu0 %v389, 1
        %v437 = vpop.permute.xlu0 %436
        %v440 = vsel %vm271, %v429, %v435
        %v441 = vsel %vm271, %v431, %v437
        %v442 = vsel %vm258, %v440, 0.0
        %v443 = vsel %vm258, %v441, 0.0
        %v444 = vsub.f32 %v426, %v442
        %v445 = vsub.f32 %v427, %v443
        %v446 = vmul.f32 %v410, %v410
        %v447 = vmul.f32 %v411, %v411
        %v448 = vmul.f32 %v444, %v444
        %v449 = vmul.f32 %v445, %v445
        %v450 = vadd.f32 %v446, %v448
        %v451 = vadd.f32 %v447, %v449
        %v452 = vadd.f32 %v450, 1e-06
        %v453 = vadd.f32 %v451, 1e-06
        %v454 = vrsqrt.pop %v452
        %v455 = vmul.f32 %v452, %v454
        %vm456 = vcmp.eq.f32.partialorder %v452, inf
        %v457 = vsel %vm456, %v452, %v455
        %vm458 = vcmp.eq.f32.partialorder %v452, 0.0
        %v459 = vand.u32 %v452, 2147483648
        %v460 = vsel %vm458, %v459, %v457
        %v461 = vrsqrt.pop %v453
        %v462 = vmul.f32 %v453, %v461
        %vm463 = vcmp.eq.f32.partialorder %v453, inf
        %v464 = vsel %vm463, %v453, %v462
        %vm465 = vcmp.eq.f32.partialorder %v453, 0.0
        %v466 = vand.u32 %v453, 2147483648
        %v467 = vsel %vm465, %v466, %v464
        %s468 = scalar_lea.vmem %s202, 32 [#allocation5]
        %469 = vst.msk [vmem:[%s468] sm:$0xff] %vm300, %v460
        %470 = vst.msk [vmem:[%s468 + $0x8] sm:$0xff] %vm300, %v467
        %s471 = sand.u32 %s97, 1
        %s472 = scalar_lea.sflag [#allocation4], %s471
        %s473 = sand.u32 %s97, 1
        %s474 = smul.addr %s473, 48
        %s475 = scalar_lea.vmem [#allocation5], %s474
        // Predicated region
        $region33: #{get_gradient_nopadding.1} parent=27 // pred_check
          %p476 = pneg %p107
        $region34: #{get_gradient_nopadding.1} parent=27 // pred_check_branch
          %478 = sbr.rel (%p476) target = $region36
        $region35: #{get_gradient_nopadding.1} parent=27 // pred_region
          %s479 = smul.u32 2, %s24
          %s481 = ssub.s32 768, 768
          %482 = vsyncadd %s472, %s481
          %s483 = smul.addr %s23, 6
          %s484 = sadd.s32 %s479, %s483
          %s485 = smul.addr %s484, 128
          %s486 = scalar_lea.hbm %s2, %s485
          %s487 = sshll.u32 %s475, 4
          %s488 = int_to_ptr.vmem [resolvable:$true] %s487
          %493 = dma.vmem_to_hbm [thread:$0]  %s488, 768, %s486, %s472, 128, 128, 8
        $region36: #{get_gradient_nopadding.1} parent=27 // pred_fallthru
          _
      $region28: #{get_gradient_nopadding.1} parent=5 // pred_fallthru
        _
      %p494 = scmp.le.s32.totalorder 2, %s14
      // Predicated region
      $region37: #{get_gradient_nopadding.1} parent=5 // pred_check
        %p495 = pneg %p494
      $region38: #{get_gradient_nopadding.1} parent=5 // pred_check_branch
        %497 = sbr.rel (%p495) target = $region40
      $region39: #{get_gradient_nopadding.1} parent=5 // pred_region
        %s498 = ssub.s32 %s14, 2
        // Predicated region
        $region41: #{get_gradient_nopadding.1} parent=39 // pred_check
          %p499 = pneg %p113
        $region42: #{get_gradient_nopadding.1} parent=39 // pred_check_branch
          %501 = sbr.rel (%p499) target = $region44
        $region43: #{get_gradient_nopadding.1} parent=39 // pred_region
          %s502 = sand.u32 %s98, 1
          %s503 = scalar_lea.sflag [#allocation4], %s502
          %s504 = sand.u32 %s98, 1
          %s505 = smul.addr %s504, 48
          %s506 = scalar_lea.vmem [#allocation5], %s505
          %507 = dma.done %s503, 768
        $region44: #{get_gradient_nopadding.1} parent=39 // pred_fallthru
          _
      $region40: #{get_gradient_nopadding.1} parent=5 // pred_fallthru
        _
    $region6: #{get_gradient_nopadding.1} parent=1 // loop_footer
      %s18 = sadd.s32 1, %s14
    $region7: #{get_gradient_nopadding.1} parent=1 // loop_footer_branch
      %13 = sbr.rel target = $region3
    $region8: #{get_gradient_nopadding.1} parent=1 // loop_exit
      _
    %508 = vsyncpa [#allocation3], 1
    %s509 = scalar_lea.sflag [#allocation3], 1
    %510 = vsyncpa %s509, 1
    %511 = vsyncpa [#allocation4], 1
    %s512 = scalar_lea.sflag [#allocation4], 1
    %513 = vsyncpa %s512, 1

</llo_original>
